<compile_context>
chip_gen: v7x
topology: tpu7x:2x2x1
jax: 0.10.0
libtpu: 0.0.40
codegen_flags: <defaults>
</compile_context>

<pallas_src>
import math

import jax
import jax.numpy as jnp
from jax import lax
from jax.experimental import pallas as pl
from jax.experimental.pallas import tpu as pltpu


def _round_up(x, m):
    return (x + m - 1) // m * m


def _same_padding_amounts(H, W, kh, kw, stride, dilation):
    """Reproduces conv2d_same_padding's padding math exactly.

    Note: the reference computes padding_cols / cols_odd from the ROW dimension
    and ROW kernel size (a quirk of the original module); we replicate it
    bit-for-bit so the output matches the PyTorch module (and, like the
    original, diverges from true TF-SAME whenever H != W or kh != kw).
    """
    sh, sw = stride
    dh, dw = dilation
    out_rows = (H + sh - 1) // sh
    padding_rows = max(0, (out_rows - 1) * sh + (kh - 1) * dh + 1 - H)
    rows_odd = padding_rows % 2 != 0
    padding_cols = max(0, (out_rows - 1) * sh + (kh - 1) * dh + 1 - H)
    cols_odd = padding_rows % 2 != 0
    pad_top = padding_rows // 2
    pad_bottom = padding_rows // 2 + int(rows_odd)
    pad_left = padding_cols // 2
    pad_right = padding_cols // 2 + int(cols_odd)
    return pad_top, pad_bottom, pad_left, pad_right


def conv2d_same_padding_pallas(x_nchw, weight_oihw, bias,
                               stride=(1, 1), dilation=(1, 1), groups=1,
                               compute_dtype=jnp.bfloat16):
    """Forward pass of the PyTorch Conv2d module (conv2d_same_padding)."""
    assert stride == (1, 1) and dilation == (1, 1) and groups == 1

    N, Cin, H, W = x_nchw.shape
    Cout, Cin_w, kh, kw = weight_oihw.shape
    assert Cin_w == Cin

    pt, pb, pleft, pright = _same_padding_amounts(H, W, kh, kw, stride, dilation)
    Hp, Wp = H + pt + pb, W + pleft + pright
    Ho, Wo = Hp - kh + 1, Wp - kw + 1
    HpWp = Hp * Wp
    K = Cin * kh * kw

    # ---- static tiling / layout parameters --------------------------------
    SEG = _round_up(HpWp, 128)               # per-image lane segment (lane-dense)
    L = N * SEG                              # folded batch lane axis
    max_shift = (kh - 1) * Wp + (kw - 1)     # largest tap offset, in lanes
    HALO = _round_up(max_shift, 128) if max_shift else 0
    G = 2 if L % 256 == 0 else 1             # >=2 lane tiles keep both v7x TCs busy
    LT = L // G                              # output lanes per grid step (mult of 128)
    LT_IN = LT + HALO                        # input slab lanes (incl. tap halo)
    pack = 16 if jnp.dtype(compute_dtype).itemsize == 2 else 8
    K_pad = _round_up(K, pack)               # contraction dim, sublane-pack aligned

    # ---- wrapper-side layout plumbing (tiny, fusible XLA ops) --------------
    x_pad = jnp.pad(x_nchw, ((0, 0), (0, 0), (pt, pb), (pleft, pright)))
    x_pad = x_pad.astype(compute_dtype)
    # channels-first, one flattened padded image per lane segment
    x_ci = jnp.transpose(x_pad, (1, 0, 2, 3)).reshape(Cin, N, HpWp)
    x_ci = jnp.pad(x_ci, ((0, 0), (0, 0), (0, SEG - HpWp)))
    x_lanes = jnp.pad(x_ci.reshape(Cin, L), ((0, 0), (0, HALO)))  # (Cin, L+HALO)
    # overlapping halo slabs, one per lane tile (so in-kernel slices are static)
    slabs = jnp.stack([x_lanes[:, g * LT:g * LT + LT_IN] for g in range(G)], axis=0)

    # tap-major / channel-minor flattened weights, zero-padded to K_pad
    w2d = jnp.transpose(weight_oihw, (0, 2, 3, 1)).reshape(Cout, K)
    w2d = jnp.pad(w2d, ((0, 0), (0, K_pad - K))).astype(compute_dtype)
    b2d = bias.reshape(Cout, 1).astype(jnp.float32)

    taps = [(i, j) for i in range(kh) for j in range(kw)]

    def conv_kernel(x_ref, w_ref, b_ref, o_ref, p_scr):
        # x_ref : (1, Cin, LT_IN) bf16  halo'd lane slab of the folded batch
        # w_ref : (Cout, K_pad)   bf16  tap-major flattened weights (zero-padded)
        # b_ref : (Cout, 1)       f32   bias
        # o_ref : (Cout, LT)      f32   lane-dense output tile
        # p_scr : (K_pad, LT)     bf16  in-kernel im2col patch matrix (VMEM)
        x = x_ref[0]                                            # (Cin, LT_IN)
        for t, (i, j) in enumerate(taps):                       # static, kh*kw small
            s = i * Wp + j                                      # lane shift of tap
            p_scr[t * Cin:(t + 1) * Cin, :] = x[:, s:s + LT]
        if K_pad > K:                                           # keep padded rows 0
            p_scr[K:, :] = jnp.zeros((K_pad - K, LT), dtype=p_scr.dtype)
        acc = jnp.dot(w_ref[...], p_scr[...],
                      preferred_element_type=jnp.float32)       # (Cout, LT) f32
        # f32 epilogue: bias never rounded to bf16; v5e's VPU has no bf16 path.
        o_ref[...] = (acc + b_ref[...]).astype(o_ref.dtype)

    cost = pl.CostEstimate(
        flops=2 * N * Cout * K * Ho * Wo,
        transcendentals=0,
        bytes_accessed=(slabs.size * slabs.dtype.itemsize
                        + w2d.size * w2d.dtype.itemsize
                        + b2d.size * 4 + Cout * L * 4))

    out_lanes = pl.pallas_call(
        conv_kernel,
        out_shape=jax.ShapeDtypeStruct((Cout, L), jnp.float32),
        grid_spec=pltpu.PrefetchScalarGridSpec(
            num_scalar_prefetch=0,
            grid=(G,),
            in_specs=[
                pl.BlockSpec((1, Cin, LT_IN), lambda g: (g, 0, 0)),
                pl.BlockSpec((Cout, K_pad), lambda g: (0, 0)),
                pl.BlockSpec((Cout, 1), lambda g: (0, 0)),
            ],
            out_specs=pl.BlockSpec((Cout, LT), lambda g: (0, g)),
            scratch_shapes=[pltpu.VMEM((K_pad, LT), compute_dtype)],
        ),
        compiler_params=pltpu.CompilerParams(
            dimension_semantics=("parallel",),   # lane tiles are independent
        ),
        cost_estimate=cost,
    )(slabs, w2d, b2d)

    # unfold lanes: (Cout, N*SEG) -> NCHW, dropping segment pad & invalid coords
    out = out_lanes.reshape(Cout, N, SEG)[:, :, :HpWp]
    out = jnp.transpose(out, (1, 0, 2)).reshape(N, Cout, Hp, Wp)[:, :, :Ho, :Wo]
    return out.astype(x_nchw.dtype)


def _reference(x_nchw, weight_oihw, bias, stride=(1, 1), dilation=(1, 1),
               compute_dtype=None):
    """Pure-JAX reference mirroring conv2d_same_padding (for the self-check)."""
    N, Cin, H, W = x_nchw.shape
    Cout, _, kh, kw = weight_oihw.shape
    pt, pb, pleft, pright = _same_padding_amounts(H, W, kh, kw, stride, dilation)
    xx = x_nchw if compute_dtype is None else x_nchw.astype(compute_dtype)
    ww = weight_oihw if compute_dtype is None else weight_oihw.astype(compute_dtype)
    out = lax.conv_general_dilated(
        xx, ww,
        window_strides=stride,
        padding=((pt, pb), (pleft, pright)),
        rhs_dilation=dilation,
        dimension_numbers=("NCHW", "OIHW", "NCHW"),
        preferred_element_type=jnp.float32)
    return (out + bias.reshape(1, Cout, 1, 1).astype(jnp.float32)).astype(x_nchw.dtype)


if __name__ == "__main__":
    # module config: Conv2d(in_channels=4, out_channels=8, kernel_size=3)
    N, Cin, H, W = 2, 4, 16, 16
    Cout, kh, kw = 8, 3, 3

    key = jax.random.PRNGKey(0)
    kx, kwt, kb = jax.random.split(key, 3)

    x = jax.random.normal(kx, (N, Cin, H, W), dtype=jnp.float32)

    # deterministic init matching _ConvNd.reset_parameters: U(-stdv, stdv)
    n = Cin * kh * kw
    stdv = 1.0 / math.sqrt(n)
    weight = jax.random.uniform(kwt, (Cout, Cin, kh, kw),
                                minval=-stdv, maxval=stdv, dtype=jnp.float32)
    bias = jax.random.uniform(kb, (Cout,),
                              minval=-stdv, maxval=stdv, dtype=jnp.float32)

    fwd = jax.jit(conv2d_same_padding_pallas)   # fuse the tiny wrapper layout ops
    out = jax.block_until_ready(fwd(x, weight, bias))

    # matched-precision reference (same bf16 operands, f32 accumulation)
    ref_bf16 = _reference(x, weight, bias, compute_dtype=jnp.bfloat16)
    assert out.shape == ref_bf16.shape
    assert jnp.allclose(out, ref_bf16, atol=1e-3, rtol=1e-3)

    # loose sanity check against the pure-f32 reference (bf16 operand rounding only)
    ref_f32 = _reference(x, weight, bias)
    assert jnp.allclose(out, ref_f32, atol=5e-2, rtol=5e-2)

    print("KERNEL_OK")
</pallas_src>

<mosaic_0001>
module attributes {stable_mosaic.version = 11 : i64} {
  func.func @conv_kernel(%arg0: i32, %arg1: memref<1x4x512xbf16, #tpu.memory_space<vmem>>, %arg2: memref<8x48xbf16, #tpu.memory_space<vmem>>, %arg3: memref<8x1xf32, #tpu.memory_space<vmem>>, %arg4: memref<8x384xf32, #tpu.memory_space<vmem>>, %arg5: memref<48x384xbf16, #tpu.memory_space<vmem>>) attributes {dimension_semantics = [#tpu.dimension_semantics<parallel>], iteration_bounds = array<i64: 2>, scalar_prefetch = 0 : i64, scratch_operands = 1 : i64, tpu.core_type = #tpu.core_type<tc>, window_params = [{transform_indices = @transform_0, window_bounds = array<i64: 1, 4, 512>}, {pipeline_mode = #tpu.pipeline_mode<synchronous>, transform_indices = @transform_1, window_bounds = array<i64: 8, 48>}, {pipeline_mode = #tpu.pipeline_mode<synchronous>, transform_indices = @transform_2, window_bounds = array<i64: 8, 1>}, {transform_indices = @transform_3, window_bounds = array<i64: 8, 384>}]} {
    %c0 = arith.constant 0 : index
    %c0_0 = arith.constant 0 : index
    %c0_1 = arith.constant 0 : index
    %0 = vector.load %arg1[%c0, %c0_0, %c0_1] : memref<1x4x512xbf16, #tpu.memory_space<vmem>>, vector<1x4x512xbf16>
    %1 = vector.shape_cast %0 : vector<1x4x512xbf16> to vector<4x512xbf16>
    %2 = vector.extract_strided_slice %1 {offsets = [0, 0], sizes = [4, 384], strides = [1, 1]} : vector<4x512xbf16> to vector<4x384xbf16>
    %c0_2 = arith.constant 0 : index
    %c0_3 = arith.constant 0 : index
    %3 = vector.load %arg5[%c0_2, %c0_3] : memref<48x384xbf16, #tpu.memory_space<vmem>>, vector<4x384xbf16>
    tpu.vector_store %arg5[%c0_2, %c0_3], %2 {strides = array<i32>} : memref<48x384xbf16, #tpu.memory_space<vmem>>, vector<4x384xbf16>,
    %4 = vector.extract_strided_slice %1 {offsets = [0, 1], sizes = [4, 384], strides = [1, 1]} : vector<4x512xbf16> to vector<4x384xbf16>
    %c4 = arith.constant 4 : index
    %c0_4 = arith.constant 0 : index
    %5 = vector.load %arg5[%c4, %c0_4] : memref<48x384xbf16, #tpu.memory_space<vmem>>, vector<4x384xbf16>
    tpu.vector_store %arg5[%c4, %c0_4], %4 {strides = array<i32>} : memref<48x384xbf16, #tpu.memory_space<vmem>>, vector<4x384xbf16>,
    %6 = vector.extract_strided_slice %1 {offsets = [0, 2], sizes = [4, 384], strides = [1, 1]} : vector<4x512xbf16> to vector<4x384xbf16>
    %c8 = arith.constant 8 : index
    %c0_5 = arith.constant 0 : index
    %7 = vector.load %arg5[%c8, %c0_5] : memref<48x384xbf16, #tpu.memory_space<vmem>>, vector<4x384xbf16>
    tpu.vector_store %arg5[%c8, %c0_5], %6 {strides = array<i32>} : memref<48x384xbf16, #tpu.memory_space<vmem>>, vector<4x384xbf16>,
    %8 = vector.extract_strided_slice %1 {offsets = [0, 18], sizes = [4, 384], strides = [1, 1]} : vector<4x512xbf16> to vector<4x384xbf16>
    %c12 = arith.constant 12 : index
    %c0_6 = arith.constant 0 : index
    %9 = vector.load %arg5[%c12, %c0_6] : memref<48x384xbf16, #tpu.memory_space<vmem>>, vector<4x384xbf16>
    tpu.vector_store %arg5[%c12, %c0_6], %8 {strides = array<i32>} : memref<48x384xbf16, #tpu.memory_space<vmem>>, vector<4x384xbf16>,
    %10 = vector.extract_strided_slice %1 {offsets = [0, 19], sizes = [4, 384], strides = [1, 1]} : vector<4x512xbf16> to vector<4x384xbf16>
    %c16 = arith.constant 16 : index
    %c0_7 = arith.constant 0 : index
    %11 = vector.load %arg5[%c16, %c0_7] : memref<48x384xbf16, #tpu.memory_space<vmem>>, vector<4x384xbf16>
    tpu.vector_store %arg5[%c16, %c0_7], %10 {strides = array<i32>} : memref<48x384xbf16, #tpu.memory_space<vmem>>, vector<4x384xbf16>,
    %12 = vector.extract_strided_slice %1 {offsets = [0, 20], sizes = [4, 384], strides = [1, 1]} : vector<4x512xbf16> to vector<4x384xbf16>
    %c20 = arith.constant 20 : index
    %c0_8 = arith.constant 0 : index
    %13 = vector.load %arg5[%c20, %c0_8] : memref<48x384xbf16, #tpu.memory_space<vmem>>, vector<4x384xbf16>
    tpu.vector_store %arg5[%c20, %c0_8], %12 {strides = array<i32>} : memref<48x384xbf16, #tpu.memory_space<vmem>>, vector<4x384xbf16>,
    %14 = vector.extract_strided_slice %1 {offsets = [0, 36], sizes = [4, 384], strides = [1, 1]} : vector<4x512xbf16> to vector<4x384xbf16>
    %c24 = arith.constant 24 : index
    %c0_9 = arith.constant 0 : index
    %15 = vector.load %arg5[%c24, %c0_9] : memref<48x384xbf16, #tpu.memory_space<vmem>>, vector<4x384xbf16>
    tpu.vector_store %arg5[%c24, %c0_9], %14 {strides = array<i32>} : memref<48x384xbf16, #tpu.memory_space<vmem>>, vector<4x384xbf16>,
    %16 = vector.extract_strided_slice %1 {offsets = [0, 37], sizes = [4, 384], strides = [1, 1]} : vector<4x512xbf16> to vector<4x384xbf16>
    %c28 = arith.constant 28 : index
    %c0_10 = arith.constant 0 : index
    %17 = vector.load %arg5[%c28, %c0_10] : memref<48x384xbf16, #tpu.memory_space<vmem>>, vector<4x384xbf16>
    tpu.vector_store %arg5[%c28, %c0_10], %16 {strides = array<i32>} : memref<48x384xbf16, #tpu.memory_space<vmem>>, vector<4x384xbf16>,
    %18 = vector.extract_strided_slice %1 {offsets = [0, 38], sizes = [4, 384], strides = [1, 1]} : vector<4x512xbf16> to vector<4x384xbf16>
    %c32 = arith.constant 32 : index
    %c0_11 = arith.constant 0 : index
    %19 = vector.load %arg5[%c32, %c0_11] : memref<48x384xbf16, #tpu.memory_space<vmem>>, vector<4x384xbf16>
    tpu.vector_store %arg5[%c32, %c0_11], %18 {strides = array<i32>} : memref<48x384xbf16, #tpu.memory_space<vmem>>, vector<4x384xbf16>,
    %cst = arith.constant 0.000000e+00 : bf16
    %20 = vector.broadcast %cst : bf16 to vector<12x384xbf16>
    %c36 = arith.constant 36 : index
    %c0_12 = arith.constant 0 : index
    %21 = vector.load %arg5[%c36, %c0_12] : memref<48x384xbf16, #tpu.memory_space<vmem>>, vector<12x384xbf16>
    tpu.vector_store %arg5[%c36, %c0_12], %20 {strides = array<i32>} : memref<48x384xbf16, #tpu.memory_space<vmem>>, vector<12x384xbf16>,
    %c0_13 = arith.constant 0 : index
    %c0_14 = arith.constant 0 : index
    %22 = vector.load %arg2[%c0_13, %c0_14] : memref<8x48xbf16, #tpu.memory_space<vmem>>, vector<8x48xbf16>
    %c0_15 = arith.constant 0 : index
    %c0_16 = arith.constant 0 : index
    %23 = vector.load %arg5[%c0_15, %c0_16] : memref<48x384xbf16, #tpu.memory_space<vmem>>, vector<48x384xbf16>
    %cst_17 = arith.constant dense<0.000000e+00> : vector<8x384xf32>
    %24 = tpu.matmul %22, %23, %cst_17 {dimension_numbers = #tpu.dot_dimension_numbers<[1], [0], [0], [1], [0, 0, 1, 1], [], []>} : vector<8x48xbf16>, vector<48x384xbf16>, vector<8x384xf32> -> vector<8x384xf32>
    %c0_18 = arith.constant 0 : index
    %c0_19 = arith.constant 0 : index
    %25 = vector.load %arg3[%c0_18, %c0_19] : memref<8x1xf32, #tpu.memory_space<vmem>>, vector<8x1xf32>
    %26 = vector.broadcast %25 : vector<8x1xf32> to vector<8x384xf32>
    %27 = arith.addf %24, %26 : vector<8x384xf32>
    %c0_20 = arith.constant 0 : index
    %c0_21 = arith.constant 0 : index
    %28 = vector.load %arg4[%c0_20, %c0_21] : memref<8x384xf32, #tpu.memory_space<vmem>>, vector<8x384xf32>
    tpu.vector_store %arg4[%c0_20, %c0_21], %27 {strides = array<i32>} : memref<8x384xf32, #tpu.memory_space<vmem>>, vector<8x384xf32>,
    return
  }
  func.func @transform_0(%arg0: i32) -> (i32, i32, i32) {
    %c0_i32 = arith.constant 0 : i32
    %c0_i32_0 = arith.constant 0 : i32
    %c0_i32_1 = arith.constant 0 : i32
    return %arg0, %c0_i32, %c0_i32_0 : i32, i32, i32
  }
  func.func @transform_1(%arg0: i32) -> (i32, i32) {
    %c0_i32 = arith.constant 0 : i32
    %c0_i32_0 = arith.constant 0 : i32
    %c0_i32_1 = arith.constant 0 : i32
    return %c0_i32, %c0_i32_0 : i32, i32
  }
  func.func @transform_2(%arg0: i32) -> (i32, i32) {
    %c0_i32 = arith.constant 0 : i32
    %c0_i32_0 = arith.constant 0 : i32
    %c0_i32_1 = arith.constant 0 : i32
    return %c0_i32, %c0_i32_0 : i32, i32
  }
  func.func @transform_3(%arg0: i32) -> (i32, i32) {
    %c0_i32 = arith.constant 0 : i32
    %c0_i32_0 = arith.constant 0 : i32
    return %c0_i32, %arg0 : i32, i32
  }
}

</mosaic_0001>

<llo_original>
// kernel: conv2d_same_padding_pallas.1
$region0: #{conv2d_same_padding_pallas.1}
  #allocation0 [shape = 'u32[]', space=smem, size = 0x4, offset = 0x4, fixed_abs, tag = 'smem constant byte address 0x4 - core index']
  #allocation1 [shape = 'u32[144,128]{1,0:T(1,128)}', space=vmem, size = 0x12000, scoped, tag = 'internal scratch']
  #allocation2 [shape = 'bf16[48,384]{1,0:T(16,128)(2,1)}', space=vmem, size = 0x9000, scoped, tag = 'scratch operand']
  %s0 = inlined_call_operand.vmem [shape: bf16[2,4,512], index: 0, kind: input, shape index: {}]
  %s1 = inlined_call_operand.vmem [shape: bf16[8,48], index: 1, kind: input, shape index: {}]
  %s2 = inlined_call_operand.vmem [shape: f32[8,1], index: 2, kind: input, shape index: {}]
  %s3 = inlined_call_operand.vmem [shape: f32[8,768], index: 3, kind: output, shape index: {}]
  %s4 = sld [smem:[#allocation0]]
  $region45: #{conv2d_same_padding_pallas.1} parent=0
    _
  %s6 = ssub.s32 1, %s4
  %s7 = scalar_select 0, %s6, %s4
  loop: start=0, step=1, limit=4
  $region2: #{conv2d_same_padding_pallas.1} parent=0 // loop_pre_header
    _
  $region3: #{conv2d_same_padding_pallas.1} parent=0 // loop_header
    %s9 = sphi 0, %s13
    %p10 = scmp.ge.s32.totalorder %s9, 4
    %s19 = sphi 0, %s21
    %s22 = sphi 0, %s19
    %s23 = sphi 0, %s22
    %s39 = sphi 0, %s23
    %s43 = sphi 0, %s43
    %s45 = sphi 0, %s43
    %s46 = sphi 0, %s45
    %s60 = sphi 0, %s46
    %s64 = sphi 0, %s64
    %s66 = sphi 0, %s64
    %s67 = sphi 0, %s66
    %s81 = sphi 0, %s67
    %s87 = sphi 0, %s89
    %s90 = sphi 0, %s87
    %s91 = sphi 0, %s90
    %s107 = sphi 0, %s91
  $region4: #{conv2d_same_padding_pallas.1} parent=0 // loop_header_branch
    %12 = sbr.rel (%p10) target = $region8
  $region5: #{conv2d_same_padding_pallas.1} parent=0 // loop_body
    %s14 = ssub.s32 %s9, 1
    %s15 = ssub.s32 %s9, 2
    %s16 = sadd.s32 %s9, 1
    %s17 = ssub.s32 %s9, %s16
    %p18 = scmp.eq.s32.totalorder %s17, 0
    %s20 = sadd.s32 %s19, 1
    %s21 = scalar_select %p18, %s19, %s20
    %p24 = pneg %p18
    %p25 = scmp.eq.s32.totalorder %s9, 1
    %p26 = por %p24, %p25
    %p27 = scmp.ne.s32.totalorder %s19, %s22
    %p28 = scmp.eq.s32.totalorder %s9, 0
    %p29 = por %p27, %p28
    %p30 = scmp.ne.s32.totalorder %s19, %s22
    %p31 = scmp.eq.s32.totalorder %s14, 1
    %p32 = por %p30, %p31
    %p33 = scmp.ne.s32.totalorder %s22, %s23
    %p34 = scmp.eq.s32.totalorder %s14, 0
    %p35 = por %p33, %p34
    %p36 = scmp.ne.s32.totalorder %s22, %s23
    %p37 = scmp.eq.s32.totalorder %s15, 1
    %p38 = por %p36, %p37
    %p40 = scmp.ne.s32.totalorder %s23, %s39
    %p41 = scmp.eq.s32.totalorder %s15, 0
    %p42 = por %p40, %p41
    %s44 = sadd.s32 %s43, 1
    %p47 = scmp.eq.s32.totalorder %s9, 1
    %p48 = scmp.ne.s32.totalorder %s43, %s45
    %p49 = scmp.eq.s32.totalorder %s9, 0
    %p50 = por %p48, %p49
    %p51 = scmp.ne.s32.totalorder %s43, %s45
    %p52 = scmp.eq.s32.totalorder %s14, 1
    %p53 = por %p51, %p52
    %p54 = scmp.ne.s32.totalorder %s45, %s46
    %p55 = scmp.eq.s32.totalorder %s14, 0
    %p56 = por %p54, %p55
    %p57 = scmp.ne.s32.totalorder %s45, %s46
    %p58 = scmp.eq.s32.totalorder %s15, 1
    %p59 = por %p57, %p58
    %p61 = scmp.ne.s32.totalorder %s46, %s60
    %p62 = scmp.eq.s32.totalorder %s15, 0
    %p63 = por %p61, %p62
    %s65 = sadd.s32 %s64, 1
    %p68 = scmp.eq.s32.totalorder %s9, 1
    %p69 = scmp.ne.s32.totalorder %s64, %s66
    %p70 = scmp.eq.s32.totalorder %s9, 0
    %p71 = por %p69, %p70
    %p72 = scmp.ne.s32.totalorder %s64, %s66
    %p73 = scmp.eq.s32.totalorder %s14, 1
    %p74 = por %p72, %p73
    %p75 = scmp.ne.s32.totalorder %s66, %s67
    %p76 = scmp.eq.s32.totalorder %s14, 0
    %p77 = por %p75, %p76
    %p78 = scmp.ne.s32.totalorder %s66, %s67
    %p79 = scmp.eq.s32.totalorder %s15, 1
    %p80 = por %p78, %p79
    %p82 = scmp.ne.s32.totalorder %s67, %s81
    %p83 = scmp.eq.s32.totalorder %s15, 0
    %p84 = por %p82, %p83
    %s85 = ssub.s32 %s9, %s16
    %p86 = scmp.eq.s32.totalorder %s85, 0
    %s88 = sadd.s32 %s87, 1
    %s89 = scalar_select %p86, %s87, %s88
    %p92 = pneg %p86
    %p93 = scmp.eq.s32.totalorder %s9, 1
    %p94 = por %p92, %p93
    %p95 = scmp.ne.s32.totalorder %s87, %s90
    %p96 = scmp.eq.s32.totalorder %s9, 0
    %p97 = por %p95, %p96
    %p98 = scmp.ne.s32.totalorder %s87, %s90
    %p99 = scmp.eq.s32.totalorder %s14, 1
    %p100 = por %p98, %p99
    %p101 = scmp.ne.s32.totalorder %s90, %s91
    %p102 = scmp.eq.s32.totalorder %s14, 0
    %p103 = por %p101, %p102
    %p104 = scmp.ne.s32.totalorder %s90, %s91
    %p105 = scmp.eq.s32.totalorder %s15, 1
    %p106 = por %p104, %p105
    %p108 = scmp.ne.s32.totalorder %s91, %s107
    %p109 = scmp.eq.s32.totalorder %s15, 0
    %p110 = por %p108, %p109
    %p111 = scmp.le.s32.totalorder 1, %s9
    %p112 = scmp.lt.s32.totalorder %s9, 3
    %p113 = pnand %p111, %p112
    %p114 = pneg %p113
    // Predicated region
    $region9: #{conv2d_same_padding_pallas.1} parent=5 // pred_check
      _
    $region10: #{conv2d_same_padding_pallas.1} parent=5 // pred_check_branch
      %116 = sbr.rel (%p113) target = $region12
    $region11: #{conv2d_same_padding_pallas.1} parent=5 // pred_region
      %s117 = ssub.s32 %s9, 1
      // Predicated region
      $region13: #{conv2d_same_padding_pallas.1} parent=11 // pred_check
        %p118 = pneg %p56
      $region14: #{conv2d_same_padding_pallas.1} parent=11 // pred_check_branch
        %120 = sbr.rel (%p118) target = $region16
      $region15: #{conv2d_same_padding_pallas.1} parent=11 // pred_region
        _
      $region16: #{conv2d_same_padding_pallas.1} parent=11 // pred_fallthru
        _
      // Predicated region
      $region17: #{conv2d_same_padding_pallas.1} parent=11 // pred_check
        %p121 = pneg %p77
      $region18: #{conv2d_same_padding_pallas.1} parent=11 // pred_check_branch
        %123 = sbr.rel (%p121) target = $region20
      $region19: #{conv2d_same_padding_pallas.1} parent=11 // pred_region
        _
      $region20: #{conv2d_same_padding_pallas.1} parent=11 // pred_fallthru
        _
    $region12: #{conv2d_same_padding_pallas.1} parent=5 // pred_fallthru
      _
    %p124 = scmp.lt.s32.totalorder %s9, 2
    // Predicated region
    $region21: #{conv2d_same_padding_pallas.1} parent=5 // pred_check
      %p125 = pneg %p124
    $region22: #{conv2d_same_padding_pallas.1} parent=5 // pred_check_branch
      %127 = sbr.rel (%p125) target = $region24
    $region23: #{conv2d_same_padding_pallas.1} parent=5 // pred_region
      // Predicated region
      $region25: #{conv2d_same_padding_pallas.1} parent=23 // pred_check
        %p128 = pneg %p29
      $region26: #{conv2d_same_padding_pallas.1} parent=23 // pred_check_branch
        %130 = sbr.rel (%p128) target = $region28
      $region27: #{conv2d_same_padding_pallas.1} parent=23 // pred_region
        %p131 = scmp.lt.s32.totalorder %s9, 1
        %s132 = scalar_select %p131, %s9, 1
        %s133 = smul.addr %s132, 4
        %s134 = smul.addr %s133, 2
        %s135 = scalar_lea.vmem %s0, %s134
      $region28: #{conv2d_same_padding_pallas.1} parent=23 // pred_fallthru
        _
    $region24: #{conv2d_same_padding_pallas.1} parent=5 // pred_fallthru
      _
    %p136 = scmp.le.s32.totalorder 1, %s9
    %p137 = scmp.lt.s32.totalorder %s9, 3
    %p138 = pnand %p136, %p137
    %p139 = pneg %p138
    // Predicated region
    $region29: #{conv2d_same_padding_pallas.1} parent=5 // pred_check
      _
    $region30: #{conv2d_same_padding_pallas.1} parent=5 // pred_check_branch
      %141 = sbr.rel (%p138) target = $region32
    $region31: #{conv2d_same_padding_pallas.1} parent=5 // pred_region
      %s142 = ssub.s32 %s9, 1
      %p143 = scmp.lt.s32.totalorder %s14, 1
      %s144 = scalar_select %p143, %s14, 1
      %s145 = smul.addr %s144, 4
      %s146 = smul.addr %s145, 2
      %s147 = scalar_lea.vmem %s0, %s146
      %p148 = pneg %p35
      %p149 = pneg %p32
      %p150 = pneg %p56
      %p151 = pneg %p53
      %p152 = pneg %p77
      %p153 = pneg %p74
      %p154 = pneg %p103
      %p155 = pneg %p100
      %s156 = smul.u32 3, %s14
      %p157 = scmp.lt.s32.totalorder %s156, 5
      %s158 = scalar_select %p157, %s156, 5
      %s159 = smul.addr %s158, 8
      %s160 = scalar_lea.vmem %s3, %s159
      %p161 = scmp.lt.s32.totalorder %s14, 1
      %s162 = scalar_select %p161, %s14, 1
      %s163 = smul.addr %s162, 4
      %s164 = smul.addr %s163, 2
      %s165 = scalar_lea.vmem %s0, %s164
      %s166 = smul.u32 3, %s14
      %p167 = scmp.lt.s32.totalorder %s166, 5
      %s168 = scalar_select %p167, %s166, 5
      %s169 = smul.addr %s168, 8
      %s170 = scalar_lea.vmem %s3, %s169
      %s171 = smul.u32 3, %s14
      %v173 = vld [vmem:[%s165] sm:$0xff]
      %v175 = vcombine.high %v173, %v173
      %v177 = vunpack.c.l.s4 1983009808
      %v178 = vunpack.c.0.s8 %v177
      %v179 = vlaneseq
      %v180 = vshrl.u32 %v179, 7
      %v181 = vsub.s32 %v178, %v180
      %v182 = vrot.slane %v173, %v181
      %v184 = vunpack.c.l.s4 1983009808
      %v185 = vunpack.c.0.s8 %v184
      %v186 = vlaneseq
      %v187 = vshrl.u32 %v186, 7
      %v188 = vsub.s32 %v185, %v187
      %v189 = vrot.slane %v175, %v188
      %v190 = vcombine.high %v182, %v182
      %194 = vst [vmem:[#allocation2] sm:$0x3] %v182
      %195 = vst [vmem:[#allocation2 + $0x8] sm:$0x3] %v190
      %196 = vst [vmem:[#allocation2 + $0x10] sm:$0x3] %v189
      %v197 = vcombine.low %v173, %v173
      %v199 = vunpack.c.l.s4 1983009808
      %v200 = vunpack.c.0.s8 %v199
      %v201 = vlaneseq
      %v202 = vshrl.u32 %v201, 7
      %v203 = vsub.s32 %v200, %v202
      %v204 = vrot.slane %v197, %v203
      %v205 = vcombine.high %v204, %v204
      %206 = vrot.lane.b32.xlu0 %v204, 127
      %v207 = vpop.permute.xlu0 %206
      %208 = vrot.lane.b32.xlu0 %v205, 127
      %v209 = vpop.permute.xlu0 %208
      %210 = vrot.lane.b32.xlu0 %v182, 127
      %v211 = vpop.permute.xlu0 %210
      %212 = vrot.lane.b32.xlu0 %v190, 127
      %v213 = vpop.permute.xlu0 %212
      %vm214 = vcmask 1039360
      %v215 = vsel %vm214, %v207, %v209
      %v216 = vsel %vm214, %v209, %v211
      %v217 = vsel %vm214, %v211, %v213
      %221 = vst [vmem:[#allocation2] sm:$0xc] %v215
      %222 = vst [vmem:[#allocation2 + $0x8] sm:$0xc] %v216
      %223 = vst [vmem:[#allocation2 + $0x10] sm:$0xc] %v217
      %v224 = vcombine.low %v182, %v182
      %v225 = vcombine.low %v189, %v189
      %226 = vrot.lane.b32.xlu0 %v224, 126
      %v227 = vpop.permute.xlu0 %226
      %228 = vrot.lane.b32.xlu0 %v182, 126
      %v229 = vpop.permute.xlu0 %228
      %230 = vrot.lane.b32.xlu0 %v225, 126
      %v231 = vpop.permute.xlu0 %230
      %232 = vrot.lane.b32.xlu0 %v189, 126
      %v233 = vpop.permute.xlu0 %232
      %vm234 = vcmask 1031168
      %v235 = vsel %vm234, %v227, %v229
      %v236 = vsel %vm234, %v229, %v231
      %v237 = vsel %vm234, %v231, %v233
      %241 = vst [vmem:[#allocation2] sm:$0x30] %v235
      %242 = vst [vmem:[#allocation2 + $0x8] sm:$0x30] %v236
      %243 = vst [vmem:[#allocation2 + $0x10] sm:$0x30] %v237
      %v244 = vcombine.low %v204, %v204
      %245 = vrot.lane.b32.xlu0 %v244, 110
      %v246 = vpop.permute.xlu0 %245
      %247 = vrot.lane.b32.xlu0 %v204, 110
      %v248 = vpop.permute.xlu0 %247
      %249 = vrot.lane.b32.xlu0 %v224, 110
      %v250 = vpop.permute.xlu0 %249
      %251 = vrot.lane.b32.xlu0 %v182, 110
      %v252 = vpop.permute.xlu0 %251
      %vm253 = vcmask 900096
      %v254 = vsel %vm253, %v246, %v248
      %v255 = vsel %vm253, %v248, %v250
      %v256 = vsel %vm253, %v250, %v252
      %260 = vst [vmem:[#allocation2] sm:$0xc0] %v254
      %261 = vst [vmem:[#allocation2 + $0x8] sm:$0xc0] %v255
      %262 = vst [vmem:[#allocation2 + $0x10] sm:$0xc0] %v256
      %v263 = vcombine.high %v189, %v189
      %264 = vrot.lane.b32.xlu0 %v182, 109
      %v265 = vpop.permute.xlu0 %264
      %266 = vrot.lane.b32.xlu0 %v190, 109
      %v267 = vpop.permute.xlu0 %266
      %268 = vrot.lane.b32.xlu0 %v189, 109
      %v269 = vpop.permute.xlu0 %268
      %270 = vrot.lane.b32.xlu0 %v263, 109
      %v271 = vpop.permute.xlu0 %270
      %vm272 = vcmask 891904
      %v273 = vsel %vm272, %v265, %v267
      %v274 = vsel %vm272, %v267, %v269
      %v275 = vsel %vm272, %v269, %v271
      %279 = vst [vmem:[#allocation2 + $0x18] sm:$0x3] %v273
      %280 = vst [vmem:[#allocation2 + $0x20] sm:$0x3] %v274
      %281 = vst [vmem:[#allocation2 + $0x28] sm:$0x3] %v275
      %282 = vrot.lane.b32.xlu0 %v204, 108
      %v283 = vpop.permute.xlu0 %282
      %284 = vrot.lane.b32.xlu0 %v205, 108
      %v285 = vpop.permute.xlu0 %284
      %286 = vrot.lane.b32.xlu0 %v182, 108
      %v287 = vpop.permute.xlu0 %286
      %288 = vrot.lane.b32.xlu0 %v190, 108
      %v289 = vpop.permute.xlu0 %288
      %vm290 = vcmask 883712
      %v291 = vsel %vm290, %v283, %v285
      %v292 = vsel %vm290, %v285, %v287
      %v293 = vsel %vm290, %v287, %v289
      %297 = vst [vmem:[#allocation2 + $0x18] sm:$0xc] %v291
      %298 = vst [vmem:[#allocation2 + $0x20] sm:$0xc] %v292
      %299 = vst [vmem:[#allocation2 + $0x28] sm:$0xc] %v293
      %300 = vrot.lane.b32.xlu0 %v224, 92
      %v301 = vpop.permute.xlu0 %300
      %302 = vrot.lane.b32.xlu0 %v182, 92
      %v303 = vpop.permute.xlu0 %302
      %304 = vrot.lane.b32.xlu0 %v225, 92
      %v305 = vpop.permute.xlu0 %304
      %306 = vrot.lane.b32.xlu0 %v189, 92
      %v307 = vpop.permute.xlu0 %306
      %vm308 = vcmask 752640
      %v309 = vsel %vm308, %v301, %v303
      %v310 = vsel %vm308, %v303, %v305
      %v311 = vsel %vm308, %v305, %v307
      %315 = vst [vmem:[#allocation2 + $0x18] sm:$0x30] %v309
      %316 = vst [vmem:[#allocation2 + $0x20] sm:$0x30] %v310
      %317 = vst [vmem:[#allocation2 + $0x28] sm:$0x30] %v311
      %318 = vrot.lane.b32.xlu0 %v244, 91
      %v319 = vpop.permute.xlu0 %318
      %320 = vrot.lane.b32.xlu0 %v204, 91
      %v321 = vpop.permute.xlu0 %320
      %322 = vrot.lane.b32.xlu0 %v224, 91
      %v323 = vpop.permute.xlu0 %322
      %324 = vrot.lane.b32.xlu0 %v182, 91
      %v325 = vpop.permute.xlu0 %324
      %vm326 = vcmask 744448
      %v327 = vsel %vm326, %v319, %v321
      %v328 = vsel %vm326, %v321, %v323
      %v329 = vsel %vm326, %v323, %v325
      %333 = vst [vmem:[#allocation2 + $0x18] sm:$0xc0] %v327
      %334 = vst [vmem:[#allocation2 + $0x20] sm:$0xc0] %v328
      %335 = vst [vmem:[#allocation2 + $0x28] sm:$0xc0] %v329
      %336 = vrot.lane.b32.xlu0 %v182, 90
      %v337 = vpop.permute.xlu0 %336
      %338 = vrot.lane.b32.xlu0 %v190, 90
      %v339 = vpop.permute.xlu0 %338
      %340 = vrot.lane.b32.xlu0 %v189, 90
      %v341 = vpop.permute.xlu0 %340
      %342 = vrot.lane.b32.xlu0 %v263, 90
      %v343 = vpop.permute.xlu0 %342
      %vm344 = vcmask 736256
      %v345 = vsel %vm344, %v337, %v339
      %v346 = vsel %vm344, %v339, %v341
      %v347 = vsel %vm344, %v341, %v343
      %351 = vst [vmem:[#allocation2 + $0x30] sm:$0x3] %v345
      %352 = vst [vmem:[#allocation2 + $0x38] sm:$0x3] %v346
      %353 = vst [vmem:[#allocation2 + $0x40] sm:$0x3] %v347
      %354 = vst [vmem:[#allocation2 + $0x30] sm:$0xfc] 0
      %355 = vst [vmem:[#allocation2 + $0x38] sm:$0xfc] 0
      %356 = vst [vmem:[#allocation2 + $0x40] sm:$0xfc] 0
      %v357 = vld [vmem:[%s1] sm:$0xf]
      %v358 = vld [vmem:[#allocation2] sm:$0xff]
      %v359 = vld [vmem:[#allocation2 + $0x8] sm:$0xff]
      %v360 = vld [vmem:[#allocation2 + $0x10] sm:$0xff]
      %v361 = vld [vmem:[#allocation2 + $0x18] sm:$0xff]
      %v362 = vld [vmem:[#allocation2 + $0x20] sm:$0xff]
      %v363 = vld [vmem:[#allocation2 + $0x28] sm:$0xff]
      %v364 = vld [vmem:[#allocation2 + $0x30] sm:$0xff]
      %v365 = vld [vmem:[#allocation2 + $0x38] sm:$0xff]
      %v366 = vld [vmem:[#allocation2 + $0x40] sm:$0xff]
      %v367 = vld [vmem:[%s2] sm:$0xff]
      %369 = vset.pattern.permute.xlu0 0
      %370 = vperm.xlu0 %369, %v367
      %v371 = vpop.permute.xlu0 %370
      %vm373 = vcmask 392192
      %v375 = vsel %vm373, %v357, 0
      %377 = vmatprep.subr.bf16.mxu0 %v359
      %378 = vmatpush1.bf16.msra.mxu0 %v358
      %379 = vmatprep.subr.bf16.mxu0 %v362
      %380 = vmatpush1.bf16.msra.mxu0 %v361
      %381 = vmatprep.subr.bf16.mxu0 %v365
      %382 = vmatpush1.bf16.msra.mxu0 %v364
      %383 = vmatprep.subr.bf16.mxu0 0
      %384 = vmatpush1.bf16.msra.mxu0 0
      %385 = vmatprep.subr.bf16.mxu0 0
      %386 = vmatpush1.bf16.msra.mxu0 0
      %387 = vmatprep.subr.bf16.mxu0 0
      %388 = vmatpush1.bf16.msra.mxu0 0
      %389 = vmatprep.subr.bf16.mxu0 0
      %390 = vmatpush1.bf16.msra.mxu0 0
      %391 = vmatprep.subr.bf16.mxu0 0
      %392 = vmatpush1.bf16.msra.mxu0 0
      %393 = vmatprep.subr.bf16.mxu0 0
      %394 = vmatpush1.bf16.msra.mxu0 0
      %395 = vmatprep.subr.bf16.mxu0 0
      %396 = vmatpush1.bf16.msra.mxu0 0
      %397 = vmatprep.subr.bf16.mxu0 0
      %398 = vmatpush1.bf16.msra.mxu0 0
      %399 = vmatprep.subr.bf16.mxu0 0
      %400 = vmatpush1.bf16.msra.mxu0 0
      %401 = vmatprep.subr.bf16.mxu0 0
      %402 = vmatpush1.bf16.msra.mxu0 0
      %403 = vmatprep.subr.bf16.mxu0 0
      %404 = vmatpush1.bf16.msra.mxu0 0
      %405 = vmatprep.subr.bf16.mxu0 0
      %406 = vmatpush1.bf16.msra.mxu0 0
      %407 = vmatprep.subr.bf16.mxu0 0
      %408 = vmatpush1.bf16.msra.mxu0 0
      %409 = vmatprep.mubr.bf16.mxu0 0
      %410 = vmatmul.mubr.bf16.gmra.mrb[0].mxu0 %v375
      %v411 = vpop.f32.mrb[0].mxu0
      %v412 = vadd.f32 %v371, %v411
      %v413 = vpop.f32.mrb[0].mxu0
      %v414 = vadd.f32 %v371, %v413
      %v415 = vpop.f32.mrb[0].mxu0
      %v416 = vpop.f32.mrb[0].mxu0
      %417 = vdwg.mxu0
      %418 = vmatprep.subr.bf16.mxu0 0
      %419 = vmatpush1.bf16.msra.mxu0 %v360
      %420 = vmatprep.subr.bf16.mxu0 0
      %421 = vmatpush1.bf16.msra.mxu0 %v363
      %422 = vmatprep.subr.bf16.mxu0 0
      %423 = vmatpush1.bf16.msra.mxu0 %v366
      %424 = vmatprep.subr.bf16.mxu0 0
      %425 = vmatpush1.bf16.msra.mxu0 0
      %426 = vmatprep.subr.bf16.mxu0 0
      %427 = vmatpush1.bf16.msra.mxu0 0
      %428 = vmatprep.subr.bf16.mxu0 0
      %429 = vmatpush1.bf16.msra.mxu0 0
      %430 = vmatprep.subr.bf16.mxu0 0
      %431 = vmatpush1.bf16.msra.mxu0 0
      %432 = vmatprep.subr.bf16.mxu0 0
      %433 = vmatpush1.bf16.msra.mxu0 0
      %434 = vmatprep.subr.bf16.mxu0 0
      %435 = vmatpush1.bf16.msra.mxu0 0
      %436 = vmatprep.subr.bf16.mxu0 0
      %437 = vmatpush1.bf16.msra.mxu0 0
      %438 = vmatprep.subr.bf16.mxu0 0
      %439 = vmatpush1.bf16.msra.mxu0 0
      %440 = vmatprep.subr.bf16.mxu0 0
      %441 = vmatpush1.bf16.msra.mxu0 0
      %442 = vmatprep.subr.bf16.mxu0 0
      %443 = vmatpush1.bf16.msra.mxu0 0
      %444 = vmatprep.subr.bf16.mxu0 0
      %445 = vmatpush1.bf16.msra.mxu0 0
      %446 = vmatprep.subr.bf16.mxu0 0
      %447 = vmatpush1.bf16.msra.mxu0 0
      %448 = vmatprep.subr.bf16.mxu0 0
      %449 = vmatpush1.bf16.msra.mxu0 0
      %450 = vmatprep.mubr.bf16.mxu0 0
      %451 = vmatmul.mubr.bf16.gmra.mrb[0].mxu0 %v375
      %v452 = vpop.f32.mrb[0].mxu0
      %v453 = vadd.f32 %v371, %v452
      %v454 = vpop.f32.mrb[0].mxu0
      %v455 = vpop.f32.mrb[0].mxu0
      %v456 = vpop.f32.mrb[0].mxu0
      %457 = vdwg.mxu0
      %458 = vst [vmem:[%s170] sm:$0xff] %v412
      %459 = vst [vmem:[%s170 + $0x8] sm:$0xff] %v414
      %460 = vst [vmem:[%s170 + $0x10] sm:$0xff] %v453
      %s461 = smul.u32 3, %s14
      %p462 = scmp.lt.s32.totalorder %s461, 5
      %s463 = scalar_select %p462, %s461, 5
      %s464 = smul.addr %s463, 8
      %s465 = scalar_lea.vmem %s3, %s464
      // Predicated region
      $region33: #{conv2d_same_padding_pallas.1} parent=31 // pred_check
        %p466 = pneg %p100
      $region34: #{conv2d_same_padding_pallas.1} parent=31 // pred_check_branch
        %468 = sbr.rel (%p466) target = $region36
      $region35: #{conv2d_same_padding_pallas.1} parent=31 // pred_region
        %s469 = smul.u32 3, %s14
      $region36: #{conv2d_same_padding_pallas.1} parent=31 // pred_fallthru
        _
    $region32: #{conv2d_same_padding_pallas.1} parent=5 // pred_fallthru
      _
    %p470 = scmp.le.s32.totalorder 2, %s9
    // Predicated region
    $region37: #{conv2d_same_padding_pallas.1} parent=5 // pred_check
      %p471 = pneg %p470
    $region38: #{conv2d_same_padding_pallas.1} parent=5 // pred_check_branch
      %473 = sbr.rel (%p471) target = $region40
    $region39: #{conv2d_same_padding_pallas.1} parent=5 // pred_region
      %s474 = ssub.s32 %s9, 2
      // Predicated region
      $region41: #{conv2d_same_padding_pallas.1} parent=39 // pred_check
        %p475 = pneg %p106
      $region42: #{conv2d_same_padding_pallas.1} parent=39 // pred_check_branch
        %477 = sbr.rel (%p475) target = $region44
      $region43: #{conv2d_same_padding_pallas.1} parent=39 // pred_region
        %s478 = smul.u32 3, %s15
        %p479 = scmp.lt.s32.totalorder %s478, 5
        %s480 = scalar_select %p479, %s478, 5
        %s481 = smul.addr %s480, 8
        %s482 = scalar_lea.vmem %s3, %s481
      $region44: #{conv2d_same_padding_pallas.1} parent=39 // pred_fallthru
        _
    $region40: #{conv2d_same_padding_pallas.1} parent=5 // pred_fallthru
      _
  $region6: #{conv2d_same_padding_pallas.1} parent=0 // loop_footer
    %s13 = sadd.s32 1, %s9
  $region7: #{conv2d_same_padding_pallas.1} parent=0 // loop_footer_branch
    %8 = sbr.rel target = $region3
  $region8: #{conv2d_same_padding_pallas.1} parent=0 // loop_exit
    _

</llo_original>
